<compile_context>
chip_gen: v6e
topology: v6e:2x2x1
jax: 0.10.0
libtpu: 0.0.40
codegen_flags: <defaults>
</compile_context>

<pallas_src>
import jax
import jax.numpy as jnp
from jax.experimental import pallas as pl
from jax.experimental.pallas import tpu as pltpu

_LANE = 128
_SUBLANE = 8


def _round_up(x, m):
    return ((x + m - 1) // m) * m


def _pad2d(x, rows, cols):
    r, c = x.shape
    if r == rows and c == cols:
        return x
    return jnp.pad(x, ((0, rows - r), (0, cols - c)))


def _cls_head_hidden_kernel(x_ref, w1_ref, b1_ref, w2_ref, b2_ref, out_ref, h_ref):
    # x: (TB, D_in)  w1: (D_in, H_pad)  b1: (1, H_pad)
    # w2: (H_pad, TC)  b2: (1, TC)  out: (TB, TC)  h scratch: (TB, H_pad) f32
    # The pre-logits tile only depends on the batch tile -> compute it once per batch
    # tile (class-tile index j == 0) and reuse it from VMEM scratch for every class tile.
    @pl.when(pl.program_id(1) == 0)
    def _():
        h = jnp.dot(x_ref[...].astype(w1_ref.dtype), w1_ref[...],
                    preferred_element_type=jnp.float32)
        # Bias add + tanh stay in f32 (no bf16 VPU/EUP on v5e; hidden behind MXU elsewhere).
        h_ref[...] = jnp.tanh(h + b1_ref[...].astype(jnp.float32))

    logits = jnp.dot(h_ref[...].astype(w2_ref.dtype), w2_ref[...],
                     preferred_element_type=jnp.float32)
    out_ref[...] = (logits + b2_ref[...].astype(jnp.float32)).astype(out_ref.dtype)


def _cls_head_linear_kernel(x_ref, w_ref, b_ref, out_ref):
    # x: (TB, D_in)   w: (D_in, TC)   b: (1, TC)   out: (TB, TC)
    y = jnp.dot(x_ref[...].astype(w_ref.dtype), w_ref[...],
                preferred_element_type=jnp.float32)
    out_ref[...] = (y + b_ref[...].astype(jnp.float32)).astype(out_ref.dtype)


def vit_cls_head(feats, w1, b1, w2, b2, *, block_b=128, block_c=2048,
                 weight_dtype=jnp.bfloat16, out_dtype=jnp.float32):
    """ViT classification head.

    feats : (B, N, D) token features.
    w1/b1 : optional pre-logits Linear stored as (D, H) / (H,). None => hidden_dim=None path.
    w2/b2 : head Linear stored as (H, C) (or (D, C) when w1 is None) / (C,).
    block_b: batch tile (multiple of 8).  128 is a good default; use 256 on v6e for B >= 512
             (2x256^2 MXU), keep 128 on v5e.
    block_c: class tile (multiple of 128); bounds w2's VMEM residency for huge heads.
    weight_dtype: dtype the weights are lowered to for the MXU (bf16 default, f32 accum);
                  pass jnp.float32 (or None to keep as given) for exact fp32 semantics.
    out_dtype: dtype of the returned logits (f32 default, matching the PyTorch head).

    Returns (B, C) classification scores.
    """
    B, N, D = feats.shape
    has_hidden = w1 is not None
    C = w2.shape[1]
    assert block_b % _SUBLANE == 0 and block_c % _LANE == 0

    # ---- batch tiling: B is NOT padded.  The ragged tail block reads past the end of x
    # (garbage rows) and Pallas drops the out-of-range output rows on store, so no
    # wrapper-side pad of the (B, N*D) feats view is ever needed.
    TB = min(block_b, _round_up(B, _SUBLANE))
    if pl.cdiv(B, TB) < 2 and B > _SUBLANE:
        # Guarantee >= 2 batch tiles when possible: keeps both v7x TensorCores busy and
        # lets input/output DMAs overlap compute even at small batch.
        TB = _round_up(pl.cdiv(B, 2), _SUBLANE)
    nB = pl.cdiv(B, TB)

    # ---- class tiling: lane-dense output store, VMEM bounded independently of C.
    C_lane = _round_up(C, _LANE)
    if C_lane <= block_c:
        TC, C_pad = C_lane, C_lane
    else:
        TC, C_pad = block_c, _round_up(C, block_c)
    nC = C_pad // TC

    # ---- cls-token input.
    if D % _LANE == 0:
        # In-kernel cls-token extraction: view feats as (B, N*D) (free reshape) and let the
        # BlockSpec fetch only the first D lanes of each row == feats[:, 0, :].
        D_in = D
        x = feats.reshape(B, N * D)
    else:
        # TODO(synk): fully in-kernel token-0 extraction for unaligned D (squeezed middle-dim
        # BlockSpec); fall back to one (B, D) slice — tiny next to feats — with no D padding
        # (Mosaic handles the unaligned contraction dim inside the dot).
        D_in = D
        x = feats[:, 0]

    def prep_w(w):
        return w if weight_dtype is None else w.astype(weight_dtype)

    x_spec = pl.BlockSpec((TB, D_in), lambda i, j: (i, 0))
    out_spec = pl.BlockSpec((TB, TC), lambda i, j: (i, j))

    # Constant-index blocks are fetched once and single-buffered: double-buffering a block
    # whose index never changes only doubles its VMEM footprint.
    def const_spec(shape):
        return pl.BlockSpec(shape, lambda i, j: (0,) * len(shape),
                            pipeline_mode=pl.Buffered(1))

    def ctile_spec(shape):  # blocks tiled along the class axis
        if nC == 1:
            return const_spec(shape)
        return pl.BlockSpec(shape, lambda i, j: (0, j))

    w_itm = jnp.dtype(weight_dtype if weight_dtype is not None else w2.dtype).itemsize
    x_itm = jnp.dtype(feats.dtype).itemsize
    o_itm = jnp.dtype(out_dtype).itemsize
    w2_bufs = 1 if nC == 1 else 2

    if has_hidden:
        H = w1.shape[1]
        H_pad = _round_up(H, _LANE)
        w1p = _pad2d(prep_w(w1), D_in, H_pad)
        b1p = _pad2d(b1.reshape(1, H), 1, H_pad)
        w2p = _pad2d(prep_w(w2), H_pad, C_pad)
        b2p = _pad2d(b2.reshape(1, C), 1, C_pad)
        kernel = _cls_head_hidden_kernel
        in_specs = [x_spec,
                    const_spec((D_in, H_pad)), const_spec((1, H_pad)),
                    ctile_spec((H_pad, TC)), ctile_spec((1, TC))]
        operands = (x, w1p, b1p, w2p, b2p)
        scratch_shapes = [pltpu.VMEM((TB, H_pad), jnp.float32)]
        # Class axis must be "arbitrary": the h scratch written at j == 0 is reused by
        # every later j of the same batch tile.
        semantics = ("parallel", "arbitrary")
        vmem_need = (2 * TB * D_in * x_itm
                     + D_in * H_pad * w_itm + H_pad * 4
                     + w2_bufs * (H_pad * TC * w_itm + TC * 4)
                     + 2 * TB * TC * o_itm
                     + TB * H_pad * 4)
    else:
        w2p = _pad2d(prep_w(w2), D_in, C_pad)
        b2p = _pad2d(b2.reshape(1, C), 1, C_pad)
        kernel = _cls_head_linear_kernel
        in_specs = [x_spec, ctile_spec((D_in, TC)), ctile_spec((1, TC))]
        operands = (x, w2p, b2p)
        scratch_shapes = []
        semantics = ("parallel", "parallel")
        vmem_need = (2 * TB * D_in * x_itm
                     + w2_bufs * (D_in * TC * w_itm + TC * 4)
                     + 2 * TB * TC * o_itm)

    # Explicit VMEM budget (2x measured block bytes + slack), clamped to stay legal on v7x.
    vmem_limit = int(min(max(2 * vmem_need + (2 << 20), 16 << 20), 64 << 20))

    out = pl.pallas_call(
        kernel,
        out_shape=jax.ShapeDtypeStruct((B, C_pad), out_dtype),
        grid_spec=pltpu.PrefetchScalarGridSpec(
            num_scalar_prefetch=0,
            grid=(nB, nC),
            in_specs=in_specs,
            out_specs=out_spec,
            scratch_shapes=scratch_shapes,
        ),
        compiler_params=pltpu.CompilerParams(
            dimension_semantics=semantics,
            vmem_limit_bytes=vmem_limit),
    )(*operands)

    # Strip class padding; batch was never padded.
    return out[:, :C]


if __name__ == "__main__":
    key = jax.random.PRNGKey(0)
    kf, kw1, kb1, kw2, kb2, kf2, kw1b, kw3, kb3, _ = jax.random.split(key, 10)

    # --- Config A: hidden path, lane-aligned D, ragged batch (exercises the no-pad
    #     cdiv grid + masked tail store), exact fp32 weights.
    B, N, D, H, C = 20, 8, 128, 32, 10
    feats = jax.random.normal(kf, (B, N, D), dtype=jnp.float32)
    w1 = jax.random.normal(kw1, (D, H), dtype=jnp.float32) * 0.02
    b1 = jax.random.normal(kb1, (H,), dtype=jnp.float32) * 0.02
    w2 = jax.random.normal(kw2, (H, C), dtype=jnp.float32) * 0.02
    b2 = jax.random.normal(kb2, (C,), dtype=jnp.float32) * 0.02

    out = jax.block_until_ready(
        vit_cls_head(feats, w1, b1, w2, b2, weight_dtype=jnp.float32))
    ref = jnp.tanh(feats[:, 0] @ w1 + b1) @ w2 + b2
    assert out.shape == (B, C), out.shape
    assert jnp.allclose(out, ref, atol=1e-4, rtol=1e-4), (
        float(jnp.max(jnp.abs(out - ref))))

    # --- Config B: hidden path, unaligned D (wrapper slice, no D padding), fp32 weights.
    B2, N2, D2 = 2, 8, 48
    feats2 = jax.random.normal(kf2, (B2, N2, D2), dtype=jnp.float32)
    w1b = jax.random.normal(kw1b, (D2, H), dtype=jnp.float32) * 0.02
    out2 = jax.block_until_ready(
        vit_cls_head(feats2, w1b, b1, w2, b2, weight_dtype=jnp.float32))
    ref2 = jnp.tanh(feats2[:, 0] @ w1b + b1) @ w2 + b2
    assert out2.shape == (B2, C), out2.shape
    assert jnp.allclose(out2, ref2, atol=1e-4, rtol=1e-4), (
        float(jnp.max(jnp.abs(out2 - ref2))))

    # --- Config C: hidden_dim=None path (single Linear head), fp32 weights.
    w3 = jax.random.normal(kw3, (D, C), dtype=jnp.float32) * 0.02
    b3 = jax.random.normal(kb3, (C,), dtype=jnp.float32) * 0.02
    out3 = jax.block_until_ready(
        vit_cls_head(feats, None, None, w3, b3, weight_dtype=jnp.float32))
    ref3 = feats[:, 0] @ w3 + b3
    assert out3.shape == (B, C), out3.shape
    assert jnp.allclose(out3, ref3, atol=1e-4, rtol=1e-4), (
        float(jnp.max(jnp.abs(out3 - ref3))))

    # --- Config D: default bf16 MXU path (production setting), looser tolerance vs f32 ref.
    out4 = jax.block_until_ready(vit_cls_head(feats, w1, b1, w2, b2))
    assert out4.shape == (B, C) and out4.dtype == jnp.float32
    assert jnp.allclose(out4, ref, atol=1e-2, rtol=1e-2), (
        float(jnp.max(jnp.abs(out4 - ref))))

    print("KERNEL_OK")
</pallas_src>

<mosaic_0001>
module attributes {stable_mosaic.version = 11 : i64} {
  func.func @_cls_head_hidden_kernel(%arg0: i32, %arg1: i32, %arg2: memref<16x128xf32, #tpu.memory_space<vmem>>, %arg3: memref<128x128xf32, #tpu.memory_space<vmem>>, %arg4: memref<1x128xf32, #tpu.memory_space<vmem>>, %arg5: memref<128x128xf32, #tpu.memory_space<vmem>>, %arg6: memref<1x128xf32, #tpu.memory_space<vmem>>, %arg7: memref<16x128xf32, #tpu.memory_space<vmem>>, %arg8: memref<16x128xf32, #tpu.memory_space<vmem>>) attributes {dimension_semantics = [#tpu.dimension_semantics<parallel>, #tpu.dimension_semantics<arbitrary>], iteration_bounds = array<i64: 2, 1>, scalar_prefetch = 0 : i64, scratch_operands = 1 : i64, tpu.core_type = #tpu.core_type<tc>, window_params = [{transform_indices = @transform_0, window_bounds = array<i64: 16, 128>}, {pipeline_mode = #tpu.pipeline_mode<synchronous>, transform_indices = @transform_1, window_bounds = array<i64: 128, 128>}, {pipeline_mode = #tpu.pipeline_mode<synchronous>, transform_indices = @transform_2, window_bounds = array<i64: 1, 128>}, {pipeline_mode = #tpu.pipeline_mode<synchronous>, transform_indices = @transform_3, window_bounds = array<i64: 128, 128>}, {pipeline_mode = #tpu.pipeline_mode<synchronous>, transform_indices = @transform_4, window_bounds = array<i64: 1, 128>}, {transform_indices = @transform_5, window_bounds = array<i64: 16, 128>}]} {
    %c0_i32 = arith.constant 0 : i32
    %0 = arith.cmpi eq, %arg1, %c0_i32 : i32
    %1 = arith.extui %0 : i1 to i32
    %c0_i32_0 = arith.constant 0 : i32
    %2 = arith.cmpi ne, %1, %c0_i32_0 : i32
    scf.if %2 {
      %c0_8 = arith.constant 0 : index
      %c0_9 = arith.constant 0 : index
      %10 = vector.load %arg2[%c0_8, %c0_9] : memref<16x128xf32, #tpu.memory_space<vmem>>, vector<16x128xf32>
      %c0_10 = arith.constant 0 : index
      %c0_11 = arith.constant 0 : index
      %11 = vector.load %arg3[%c0_10, %c0_11] : memref<128x128xf32, #tpu.memory_space<vmem>>, vector<128x128xf32>
      %cst_12 = arith.constant dense<0.000000e+00> : vector<16x128xf32>
      %12 = tpu.matmul %10, %11, %cst_12 {dimension_numbers = #tpu.dot_dimension_numbers<[1], [0], [0], [1], [0, 0, 1, 1], [], []>} : vector<16x128xf32>, vector<128x128xf32>, vector<16x128xf32> -> vector<16x128xf32>
      %c0_13 = arith.constant 0 : index
      %c0_14 = arith.constant 0 : index
      %13 = vector.load %arg4[%c0_13, %c0_14] : memref<1x128xf32, #tpu.memory_space<vmem>>, vector<1x128xf32>
      %14 = vector.broadcast %13 : vector<1x128xf32> to vector<16x128xf32>
      %15 = arith.addf %12, %14 : vector<16x128xf32>
      %16 = math.tanh %15 : vector<16x128xf32>
      %c0_15 = arith.constant 0 : index
      %c0_16 = arith.constant 0 : index
      %17 = vector.load %arg8[%c0_15, %c0_16] : memref<16x128xf32, #tpu.memory_space<vmem>>, vector<16x128xf32>
      tpu.vector_store %arg8[%c0_15, %c0_16], %16 {strides = array<i32>} : memref<16x128xf32, #tpu.memory_space<vmem>>, vector<16x128xf32>,
    } else {
    }
    %c0 = arith.constant 0 : index
    %c0_1 = arith.constant 0 : index
    %3 = vector.load %arg8[%c0, %c0_1] : memref<16x128xf32, #tpu.memory_space<vmem>>, vector<16x128xf32>
    %c0_2 = arith.constant 0 : index
    %c0_3 = arith.constant 0 : index
    %4 = vector.load %arg5[%c0_2, %c0_3] : memref<128x128xf32, #tpu.memory_space<vmem>>, vector<128x128xf32>
    %cst = arith.constant dense<0.000000e+00> : vector<16x128xf32>
    %5 = tpu.matmul %3, %4, %cst {dimension_numbers = #tpu.dot_dimension_numbers<[1], [0], [0], [1], [0, 0, 1, 1], [], []>} : vector<16x128xf32>, vector<128x128xf32>, vector<16x128xf32> -> vector<16x128xf32>
    %c0_4 = arith.constant 0 : index
    %c0_5 = arith.constant 0 : index
    %6 = vector.load %arg6[%c0_4, %c0_5] : memref<1x128xf32, #tpu.memory_space<vmem>>, vector<1x128xf32>
    %7 = vector.broadcast %6 : vector<1x128xf32> to vector<16x128xf32>
    %8 = arith.addf %5, %7 : vector<16x128xf32>
    %c0_6 = arith.constant 0 : index
    %c0_7 = arith.constant 0 : index
    %9 = vector.load %arg7[%c0_6, %c0_7] : memref<16x128xf32, #tpu.memory_space<vmem>>, vector<16x128xf32>
    tpu.vector_store %arg7[%c0_6, %c0_7], %8 {strides = array<i32>} : memref<16x128xf32, #tpu.memory_space<vmem>>, vector<16x128xf32>,
    return
  }
  func.func @transform_0(%arg0: i32, %arg1: i32) -> (i32, i32) {
    %c0_i32 = arith.constant 0 : i32
    %c0_i32_0 = arith.constant 0 : i32
    return %arg0, %c0_i32 : i32, i32
  }
  func.func @transform_1(%arg0: i32, %arg1: i32) -> (i32, i32) {
    %c0_i32 = arith.constant 0 : i32
    %c0_i32_0 = arith.constant 0 : i32
    %c0_i32_1 = arith.constant 0 : i32
    return %c0_i32, %c0_i32_0 : i32, i32
  }
  func.func @transform_2(%arg0: i32, %arg1: i32) -> (i32, i32) {
    %c0_i32 = arith.constant 0 : i32
    %c0_i32_0 = arith.constant 0 : i32
    %c0_i32_1 = arith.constant 0 : i32
    return %c0_i32, %c0_i32_0 : i32, i32
  }
  func.func @transform_3(%arg0: i32, %arg1: i32) -> (i32, i32) {
    %c0_i32 = arith.constant 0 : i32
    %c0_i32_0 = arith.constant 0 : i32
    %c0_i32_1 = arith.constant 0 : i32
    return %c0_i32, %c0_i32_0 : i32, i32
  }
  func.func @transform_4(%arg0: i32, %arg1: i32) -> (i32, i32) {
    %c0_i32 = arith.constant 0 : i32
    %c0_i32_0 = arith.constant 0 : i32
    %c0_i32_1 = arith.constant 0 : i32
    return %c0_i32, %c0_i32_0 : i32, i32
  }
  func.func @transform_5(%arg0: i32, %arg1: i32) -> (i32, i32) {
    %c0_i32 = arith.constant 0 : i32
    return %arg0, %arg1 : i32, i32
  }
}

</mosaic_0001>

<llo_original>
// kernel: tpu_custom_call.1
$region0: #{tpu_custom_call.1}
  #allocation0 [shape = 'u32[]', space=smem, size = 0x4, offset = 0x4, fixed_abs, tag = 'smem constant byte address 0x4 - core index']
  #allocation1 [shape = 'u32[144,128]{1,0:T(1,128)}', space=vmem, size = 0x12000, scoped, tag = 'internal scratch']
  #allocation2 [shape = 'f32[16,128]{1,0:T(8,128)}', space=vmem, size = 0x2000, scoped, tag = 'scratch operand']
  %s0 = inlined_call_operand.hbm [shape: f32[20,1024], index: 0, kind: input, shape index: {}]
  %s1 = inlined_call_operand.hbm [shape: f32[128,128], index: 1, kind: input, shape index: {}]
  %s2 = inlined_call_operand.vmem [shape: f32[1,128], index: 2, kind: input, shape index: {}]
  %s3 = inlined_call_operand.hbm [shape: f32[128,128], index: 3, kind: input, shape index: {}]
  %s4 = inlined_call_operand.vmem [shape: f32[1,128], index: 4, kind: input, shape index: {}]
  %s5 = inlined_call_operand.hbm [shape: f32[20,128], index: 5, kind: output, shape index: {}]
  %s6 = sld [smem:[#allocation0]]
  $region69: #{tpu_custom_call.1} parent=0
    _
  %s8 = ssub.s32 1, %s6
  %s9 = scalar_select 0, %s8, %s6
  $region1: #{tpu_custom_call.1} parent=0
    #allocation3 [shape = 'u8[16384]{0}', space=vmem, size = 0x4000, scoped, tag = 'input window, operand 0']
    #allocation4 [shape = 's32[2]{0}', space=sflag, size = 0x8, scoped, tag = 'scoped memory for tpu_custom_call.1']
    #allocation5 [shape = 's32[2]{0}', space=sflag, size = 0x8, scoped, tag = 'scoped memory for tpu_custom_call.1']
    #allocation6 [shape = 'u8[65536]{0}', space=vmem, size = 0x10000, scoped, tag = 'input window, operand 1, single buffered']
    #allocation7 [shape = 's32[1]{0}', space=sflag, size = 0x4, scoped, tag = 'scoped memory for tpu_custom_call.1']
    #allocation8 [shape = 'u8[65536]{0}', space=vmem, size = 0x10000, scoped, tag = 'input window, operand 3, single buffered']
    #allocation9 [shape = 'u8[16384]{0}', space=vmem, size = 0x4000, scoped, tag = 'output window, operand 0']
    %10 = vsyncpa [#allocation4], 0
    %s11 = scalar_lea.sflag [#allocation4], 1
    %12 = vsyncpa %s11, 0
    %13 = vsyncpa [#allocation7], 0
    %14 = vsyncpa [#allocation5], 0
    %s15 = scalar_lea.sflag [#allocation5], 1
    %16 = vsyncpa %s15, 0
    loop: start=0, step=1, limit=4
    $region2: #{tpu_custom_call.1} parent=1 // loop_pre_header
      _
    $region3: #{tpu_custom_call.1} parent=1 // loop_header
      %s18 = sphi 0, %s22
      %p19 = scmp.ge.s32.totalorder %s18, 4
      %s25 = sphi 0, %s37
      %s26 = sphi 0, %s33
      %s27 = sphi 0, %s25
      %s28 = sphi 0, %s26
      %s29 = sphi 0, %s27
      %s30 = sphi 0, %s28
      %s40 = sphi 0, %s42
      %s43 = sphi 0, %s40
      %s44 = sphi 0, %s43
      %s60 = sphi 0, %s44
      %s64 = sphi 0, %s64
      %s66 = sphi 0, %s64
      %s67 = sphi 0, %s66
      %s81 = sphi 0, %s67
      %s85 = sphi 0, %s85
      %s87 = sphi 0, %s85
      %s88 = sphi 0, %s87
      %s102 = sphi 0, %s88
      %s106 = sphi 0, %s106
      %s108 = sphi 0, %s106
      %s109 = sphi 0, %s108
      %s123 = sphi 0, %s109
      %s127 = sphi 0, %s127
      %s129 = sphi 0, %s127
      %s130 = sphi 0, %s129
      %s144 = sphi 0, %s130
      %s152 = sphi 0, %s154
      %s155 = sphi 0, %s152
      %s156 = sphi 0, %s155
      %s172 = sphi 0, %s156
    $region4: #{tpu_custom_call.1} parent=1 // loop_header_branch
      %21 = sbr.rel (%p19) target = $region8
    $region5: #{tpu_custom_call.1} parent=1 // loop_body
      %s23 = ssub.s32 %s18, 1
      %s24 = ssub.s32 %s18, 2
      %s31 = sadd.s32 1, %s26
      %p32 = scmp.ge.s32.totalorder %s31, 1
      %s33 = scalar_select %p32, 0, %s31
      %s34 = sadd.s32 1, %s25
      %s35 = scalar_select %p32, %s34, %s25
      %p36 = scmp.ge.s32.totalorder %s35, 2
      %s37 = scalar_select %p36, 0, %s35
      %s38 = ssub.s32 %s25, %s37
      %p39 = scmp.eq.s32.totalorder %s38, 0
      %s41 = sadd.s32 %s40, 1
      %s42 = scalar_select %p39, %s40, %s41
      %p45 = pneg %p39
      %p46 = scmp.eq.s32.totalorder %s18, 1
      %p47 = por %p45, %p46
      %p48 = scmp.ne.s32.totalorder %s40, %s43
      %p49 = scmp.eq.s32.totalorder %s18, 0
      %p50 = por %p48, %p49
      %p51 = scmp.ne.s32.totalorder %s40, %s43
      %p52 = scmp.eq.s32.totalorder %s23, 1
      %p53 = por %p51, %p52
      %p54 = scmp.ne.s32.totalorder %s43, %s44
      %p55 = scmp.eq.s32.totalorder %s23, 0
      %p56 = por %p54, %p55
      %p57 = scmp.ne.s32.totalorder %s43, %s44
      %p58 = scmp.eq.s32.totalorder %s24, 1
      %p59 = por %p57, %p58
      %p61 = scmp.ne.s32.totalorder %s44, %s60
      %p62 = scmp.eq.s32.totalorder %s24, 0
      %p63 = por %p61, %p62
      %s65 = sadd.s32 %s64, 1
      %p68 = scmp.eq.s32.totalorder %s18, 1
      %p69 = scmp.ne.s32.totalorder %s64, %s66
      %p70 = scmp.eq.s32.totalorder %s18, 0
      %p71 = por %p69, %p70
      %p72 = scmp.ne.s32.totalorder %s64, %s66
      %p73 = scmp.eq.s32.totalorder %s23, 1
      %p74 = por %p72, %p73
      %p75 = scmp.ne.s32.totalorder %s66, %s67
      %p76 = scmp.eq.s32.totalorder %s23, 0
      %p77 = por %p75, %p76
      %p78 = scmp.ne.s32.totalorder %s66, %s67
      %p79 = scmp.eq.s32.totalorder %s24, 1
      %p80 = por %p78, %p79
      %p82 = scmp.ne.s32.totalorder %s67, %s81
      %p83 = scmp.eq.s32.totalorder %s24, 0
      %p84 = por %p82, %p83
      %s86 = sadd.s32 %s85, 1
      %p89 = scmp.eq.s32.totalorder %s18, 1
      %p90 = scmp.ne.s32.totalorder %s85, %s87
      %p91 = scmp.eq.s32.totalorder %s18, 0
      %p92 = por %p90, %p91
      %p93 = scmp.ne.s32.totalorder %s85, %s87
      %p94 = scmp.eq.s32.totalorder %s23, 1
      %p95 = por %p93, %p94
      %p96 = scmp.ne.s32.totalorder %s87, %s88
      %p97 = scmp.eq.s32.totalorder %s23, 0
      %p98 = por %p96, %p97
      %p99 = scmp.ne.s32.totalorder %s87, %s88
      %p100 = scmp.eq.s32.totalorder %s24, 1
      %p101 = por %p99, %p100
      %p103 = scmp.ne.s32.totalorder %s88, %s102
      %p104 = scmp.eq.s32.totalorder %s24, 0
      %p105 = por %p103, %p104
      %s107 = sadd.s32 %s106, 1
      %p110 = scmp.eq.s32.totalorder %s18, 1
      %p111 = scmp.ne.s32.totalorder %s106, %s108
      %p112 = scmp.eq.s32.totalorder %s18, 0
      %p113 = por %p111, %p112
      %p114 = scmp.ne.s32.totalorder %s106, %s108
      %p115 = scmp.eq.s32.totalorder %s23, 1
      %p116 = por %p114, %p115
      %p117 = scmp.ne.s32.totalorder %s108, %s109
      %p118 = scmp.eq.s32.totalorder %s23, 0
      %p119 = por %p117, %p118
      %p120 = scmp.ne.s32.totalorder %s108, %s109
      %p121 = scmp.eq.s32.totalorder %s24, 1
      %p122 = por %p120, %p121
      %p124 = scmp.ne.s32.totalorder %s109, %s123
      %p125 = scmp.eq.s32.totalorder %s24, 0
      %p126 = por %p124, %p125
      %s128 = sadd.s32 %s127, 1
      %p131 = scmp.eq.s32.totalorder %s18, 1
      %p132 = scmp.ne.s32.totalorder %s127, %s129
      %p133 = scmp.eq.s32.totalorder %s18, 0
      %p134 = por %p132, %p133
      %p135 = scmp.ne.s32.totalorder %s127, %s129
      %p136 = scmp.eq.s32.totalorder %s23, 1
      %p137 = por %p135, %p136
      %p138 = scmp.ne.s32.totalorder %s129, %s130
      %p139 = scmp.eq.s32.totalorder %s23, 0
      %p140 = por %p138, %p139
      %p141 = scmp.ne.s32.totalorder %s129, %s130
      %p142 = scmp.eq.s32.totalorder %s24, 1
      %p143 = por %p141, %p142
      %p145 = scmp.ne.s32.totalorder %s130, %s144
      %p146 = scmp.eq.s32.totalorder %s24, 0
      %p147 = por %p145, %p146
      %s148 = ssub.s32 %s25, %s37
      %s149 = ssub.s32 %s26, %s33
      %s150 = sor.u32 %s148, %s149
      %p151 = scmp.eq.s32.totalorder %s150, 0
      %s153 = sadd.s32 %s152, 1
      %s154 = scalar_select %p151, %s152, %s153
      %p157 = pneg %p151
      %p158 = scmp.eq.s32.totalorder %s18, 1
      %p159 = por %p157, %p158
      %p160 = scmp.ne.s32.totalorder %s152, %s155
      %p161 = scmp.eq.s32.totalorder %s18, 0
      %p162 = por %p160, %p161
      %p163 = scmp.ne.s32.totalorder %s152, %s155
      %p164 = scmp.eq.s32.totalorder %s23, 1
      %p165 = por %p163, %p164
      %p166 = scmp.ne.s32.totalorder %s155, %s156
      %p167 = scmp.eq.s32.totalorder %s23, 0
      %p168 = por %p166, %p167
      %p169 = scmp.ne.s32.totalorder %s155, %s156
      %p170 = scmp.eq.s32.totalorder %s24, 1
      %p171 = por %p169, %p170
      %p173 = scmp.ne.s32.totalorder %s156, %s172
      %p174 = scmp.eq.s32.totalorder %s24, 0
      %p175 = por %p173, %p174
      %p176 = scmp.le.s32.totalorder 1, %s18
      %p177 = scmp.lt.s32.totalorder %s18, 3
      %p178 = pnand %p176, %p177
      %p179 = pneg %p178
      // Predicated region
      $region9: #{tpu_custom_call.1} parent=5 // pred_check
        _
      $region10: #{tpu_custom_call.1} parent=5 // pred_check_branch
        %181 = sbr.rel (%p178) target = $region12
      $region11: #{tpu_custom_call.1} parent=5 // pred_region
        %s182 = ssub.s32 %s18, 1
        // Predicated region
        $region13: #{tpu_custom_call.1} parent=11 // pred_check
          %p183 = pneg %p77
        $region14: #{tpu_custom_call.1} parent=11 // pred_check_branch
          %185 = sbr.rel (%p183) target = $region16
        $region15: #{tpu_custom_call.1} parent=11 // pred_region
          %s187 = ssub.s32 2048, 2048
          %188 = vsyncadd [#allocation7], %s187
          %s189 = sshll.u32 [#allocation6], 4
          %s190 = int_to_ptr.vmem [resolvable:$true] %s189
          %195 = dma.hbm_to_vmem [thread:$0]  %s1, 2048, %s190, [#allocation7], 128, 128, 8
        $region16: #{tpu_custom_call.1} parent=11 // pred_fallthru
          _
        // Predicated region
        $region17: #{tpu_custom_call.1} parent=11 // pred_check
          %p196 = pneg %p98
        $region18: #{tpu_custom_call.1} parent=11 // pred_check_branch
          %198 = sbr.rel (%p196) target = $region20
        $region19: #{tpu_custom_call.1} parent=11 // pred_region
          _
        $region20: #{tpu_custom_call.1} parent=11 // pred_fallthru
          _
        // Predicated region
        $region21: #{tpu_custom_call.1} parent=11 // pred_check
          %p199 = pneg %p119
        $region22: #{tpu_custom_call.1} parent=11 // pred_check_branch
          %201 = sbr.rel (%p199) target = $region24
        $region23: #{tpu_custom_call.1} parent=11 // pred_region
          %s203 = ssub.s32 2048, 2048
          %204 = vsyncadd [#allocation7], %s203
          %s205 = sshll.u32 [#allocation8], 4
          %s206 = int_to_ptr.vmem [resolvable:$true] %s205
          %211 = dma.hbm_to_vmem [thread:$0]  %s3, 2048, %s206, [#allocation7], 128, 128, 8
        $region24: #{tpu_custom_call.1} parent=11 // pred_fallthru
          _
        // Predicated region
        $region25: #{tpu_custom_call.1} parent=11 // pred_check
          %p212 = pneg %p140
        $region26: #{tpu_custom_call.1} parent=11 // pred_check_branch
          %214 = sbr.rel (%p212) target = $region28
        $region27: #{tpu_custom_call.1} parent=11 // pred_region
          _
        $region28: #{tpu_custom_call.1} parent=11 // pred_fallthru
          _
      $region12: #{tpu_custom_call.1} parent=5 // pred_fallthru
        _
      %p215 = scmp.lt.s32.totalorder %s18, 2
      // Predicated region
      $region29: #{tpu_custom_call.1} parent=5 // pred_check
        %p216 = pneg %p215
      $region30: #{tpu_custom_call.1} parent=5 // pred_check_branch
        %218 = sbr.rel (%p216) target = $region32
      $region31: #{tpu_custom_call.1} parent=5 // pred_region
        // Predicated region
        $region33: #{tpu_custom_call.1} parent=31 // pred_check
          %p219 = pneg %p50
        $region34: #{tpu_custom_call.1} parent=31 // pred_check_branch
          %221 = sbr.rel (%p219) target = $region36
        $region35: #{tpu_custom_call.1} parent=31 // pred_region
          %s222 = sand.u32 %s40, 1
          %s223 = scalar_lea.sflag [#allocation4], %s222
          %s224 = sand.u32 %s40, 1
          %s225 = smul.addr %s224, 16
          %s226 = scalar_lea.vmem [#allocation3], %s225
          %s227 = smul.u32 2, %s25
          %s228 = ssub.s32 3, %s227
          %p229 = scmp.lt.s32.totalorder %s228, 2
          %s230 = scalar_select %p229, %s228, 2
          %s231 = smul.u32 128, %s230
          %s233 = ssub.s32 256, %s231
          %234 = vsyncadd %s223, %s233
          %p235 = scmp.ne.s32.totalorder 0, %s231
          %s236 = smul.addr %s227, 8
          %s237 = smul.addr %s236, 128
          %s238 = scalar_lea.hbm %s0, %s237
          %s239 = smul.u32 8, %s230
          %s240 = sshll.u32 %s226, 4
          %s241 = int_to_ptr.vmem [resolvable:$true] %s240
          %s242 = sshll.u32 %s239, 4
          %246 = dma.hbm_to_vmem [thread:$0]  (%p235), %s238, %s242, %s241, %s223, 1024, 128, 8
        $region36: #{tpu_custom_call.1} parent=31 // pred_fallthru
          _
      $region32: #{tpu_custom_call.1} parent=5 // pred_fallthru
        _
      %p247 = scmp.le.s32.totalorder 1, %s18
      %p248 = scmp.lt.s32.totalorder %s18, 3
      %p249 = pnand %p247, %p248
      %p250 = pneg %p249
      // Predicated region
      $region37: #{tpu_custom_call.1} parent=5 // pred_check
        _
      $region38: #{tpu_custom_call.1} parent=5 // pred_check_branch
        %252 = sbr.rel (%p249) target = $region40
      $region39: #{tpu_custom_call.1} parent=5 // pred_region
        %s253 = ssub.s32 %s18, 1
        %s254 = sand.u32 %s43, 1
        %s255 = scalar_lea.sflag [#allocation4], %s254
        %s256 = sand.u32 %s43, 1
        %s257 = smul.addr %s256, 16
        %s258 = scalar_lea.vmem [#allocation3], %s257
        // Predicated region
        $region41: #{tpu_custom_call.1} parent=39 // pred_check
          %p259 = pneg %p56
        $region42: #{tpu_custom_call.1} parent=39 // pred_check_branch
          %261 = sbr.rel (%p259) target = $region44
        $region43: #{tpu_custom_call.1} parent=39 // pred_region
          %262 = dma.done %s255, 256
        $region44: #{tpu_custom_call.1} parent=39 // pred_fallthru
          _
        // Predicated region
        $region45: #{tpu_custom_call.1} parent=39 // pred_check
          %p263 = pneg %p77
        $region46: #{tpu_custom_call.1} parent=39 // pred_check_branch
          %265 = sbr.rel (%p263) target = $region48
        $region47: #{tpu_custom_call.1} parent=39 // pred_region
          %266 = dma.done [#allocation7], 2048
        $region48: #{tpu_custom_call.1} parent=39 // pred_fallthru
          _
        // Predicated region
        $region49: #{tpu_custom_call.1} parent=39 // pred_check
          %p267 = pneg %p119
        $region50: #{tpu_custom_call.1} parent=39 // pred_check_branch
          %269 = sbr.rel (%p267) target = $region52
        $region51: #{tpu_custom_call.1} parent=39 // pred_region
          %270 = dma.done [#allocation7], 2048
        $region52: #{tpu_custom_call.1} parent=39 // pred_fallthru
          _
        %s271 = sand.u32 %s43, 1
        %s272 = scalar_lea.sflag [#allocation4], %s271
        %s273 = sand.u32 %s43, 1
        %s274 = smul.addr %s273, 16
        %s275 = scalar_lea.vmem [#allocation3], %s274
        %p276 = pneg %p56
        %p277 = pneg %p53
        %p278 = pneg %p77
        %p279 = pneg %p74
        %p280 = pneg %p98
        %p281 = pneg %p95
        %p282 = pneg %p119
        %p283 = pneg %p116
        %p284 = pneg %p140
        %p285 = pneg %p137
        %p286 = pneg %p168
        %p287 = pneg %p165
        %s288 = sand.u32 %s155, 1
        %s289 = scalar_lea.sflag [#allocation5], %s288
        %s290 = sand.u32 %s155, 1
        %s291 = smul.addr %s290, 16
        %s292 = scalar_lea.vmem [#allocation9], %s291
        %s293 = smul.u32 2, %s27
        %s294 = ssub.s32 3, %s293
        %p295 = scmp.lt.s32.totalorder %s294, 2
        %s296 = scalar_select %p295, %s294, 2
        %s297 = smul.u32 128, %s296
        %s298 = smul.u32 2, %s27
        %s299 = ssub.s32 3, %s298
        %p300 = scmp.lt.s32.totalorder %s299, 2
        %s301 = scalar_select %p300, %s299, 2
        %s302 = smul.u32 128, %s301
        %p303 = scmp.eq.s32.totalorder %s28, 0
        // Predicated region
        $region53: #{tpu_custom_call.1} parent=39 // pred_check
          %p304 = pneg %p303
        $region54: #{tpu_custom_call.1} parent=39 // pred_check_branch
          %306 = sbr.rel (%p304) target = $region56
        $region55: #{tpu_custom_call.1} parent=39 // pred_region
          %v307 = vld [vmem:[%s258] sm:$0xff]
          %v308 = vld [vmem:[%s258 + $0x8] sm:$0xff]
          %v309 = vld [vmem:[#allocation6] sm:$0xff]
          %v310 = vld [vmem:[#allocation6 + $0x8] sm:$0xff]
          %v311 = vld [vmem:[#allocation6 + $0x10] sm:$0xff]
          %v312 = vld [vmem:[#allocation6 + $0x18] sm:$0xff]
          %v313 = vld [vmem:[#allocation6 + $0x20] sm:$0xff]
          %v314 = vld [vmem:[#allocation6 + $0x28] sm:$0xff]
          %v315 = vld [vmem:[#allocation6 + $0x30] sm:$0xff]
          %v316 = vld [vmem:[#allocation6 + $0x38] sm:$0xff]
          %v317 = vld [vmem:[#allocation6 + $0x40] sm:$0xff]
          %v318 = vld [vmem:[#allocation6 + $0x48] sm:$0xff]
          %v319 = vld [vmem:[#allocation6 + $0x50] sm:$0xff]
          %v320 = vld [vmem:[#allocation6 + $0x58] sm:$0xff]
          %v321 = vld [vmem:[#allocation6 + $0x60] sm:$0xff]
          %v322 = vld [vmem:[#allocation6 + $0x68] sm:$0xff]
          %v323 = vld [vmem:[#allocation6 + $0x70] sm:$0xff]
          %v324 = vld [vmem:[#allocation6 + $0x78] sm:$0xff]
          %v325 = vld [vmem:[%s2] sm:$0x1]
          %v327 = vlaneseq
          %v328 = vshrl.u32 %v327, 7
          %v329 = vsub.s32 0, %v328
          %v330 = vrot.slane %v325, %v329
          %332 = vmatprep.subr.mxu0 0.0
          %333 = vmatpush1.msra.mxu0 %v324
          %334 = vmatprep.subr.mxu0 0.0
          %335 = vmatpush1.msra.mxu0 %v323
          %336 = vmatprep.subr.mxu0 0.0
          %337 = vmatpush1.msra.mxu0 %v322
          %338 = vmatprep.subr.mxu0 0.0
          %339 = vmatpush1.msra.mxu0 %v321
          %340 = vmatprep.subr.mxu0 0.0
          %341 = vmatpush1.msra.mxu0 %v320
          %342 = vmatprep.subr.mxu0 0.0
          %343 = vmatpush1.msra.mxu0 %v319
          %344 = vmatprep.subr.mxu0 0.0
          %345 = vmatpush1.msra.mxu0 %v318
          %346 = vmatprep.subr.mxu0 0.0
          %347 = vmatpush1.msra.mxu0 %v317
          %348 = vmatprep.subr.mxu0 0.0
          %349 = vmatpush1.msra.mxu0 %v316
          %350 = vmatprep.subr.mxu0 0.0
          %351 = vmatpush1.msra.mxu0 %v315
          %352 = vmatprep.subr.mxu0 0.0
          %353 = vmatpush1.msra.mxu0 %v314
          %354 = vmatprep.subr.mxu0 0.0
          %355 = vmatpush1.msra.mxu0 %v313
          %356 = vmatprep.subr.mxu0 0.0
          %357 = vmatpush1.msra.mxu0 %v312
          %358 = vmatprep.subr.mxu0 0.0
          %359 = vmatpush1.msra.mxu0 %v311
          %360 = vmatprep.subr.mxu0 0.0
          %361 = vmatpush1.msra.mxu0 %v310
          %362 = vmatprep.subr.mxu0 0.0
          %363 = vmatpush1.msra.mxu0 %v309
          %364 = vmatprep.subr.mxu0 0.0
          %365 = vmatpush2.msra.mxu0 0.0
          %366 = vmatprep.subr.mxu0 0.0
          %367 = vmatpush2.msra.mxu0 0.0
          %368 = vmatprep.subr.mxu0 0.0
          %369 = vmatpush2.msra.mxu0 0.0
          %370 = vmatprep.subr.mxu0 0.0
          %371 = vmatpush2.msra.mxu0 0.0
          %372 = vmatprep.subr.mxu0 0.0
          %373 = vmatpush2.msra.mxu0 0.0
          %374 = vmatprep.subr.mxu0 0.0
          %375 = vmatpush2.msra.mxu0 0.0
          %376 = vmatprep.subr.mxu0 0.0
          %377 = vmatpush2.msra.mxu0 0.0
          %378 = vmatprep.subr.mxu0 0.0
          %379 = vmatpush2.msra.mxu0 0.0
          %380 = vmatprep.subr.mxu0 0.0
          %381 = vmatpush2.msra.mxu0 0.0
          %382 = vmatprep.subr.mxu0 0.0
          %383 = vmatpush2.msra.mxu0 0.0
          %384 = vmatprep.subr.mxu0 0.0
          %385 = vmatpush2.msra.mxu0 0.0
          %386 = vmatprep.subr.mxu0 0.0
          %387 = vmatpush2.msra.mxu0 0.0
          %388 = vmatprep.subr.mxu0 0.0
          %389 = vmatpush2.msra.mxu0 0.0
          %390 = vmatprep.subr.mxu0 0.0
          %391 = vmatpush2.msra.mxu0 0.0
          %392 = vmatprep.subr.mxu0 0.0
          %393 = vmatpush2.msra.mxu0 0.0
          %394 = vmatprep.subr.mxu0 0.0
          %395 = vmatpush2.msra.mxu0 0.0
          %396 = vmatprep.mubr.f32.mxu0 0.0
          %397 = vmatmul.mubr.f32.gmra.mxu0 %v307
          %v398 = vpop.f32.mrf.mxu0
          %v399 = vadd.f32 %v330, %v398
          %v400 = vpop.f32.mrf.mxu0
          %401 = vmatprep.mubr.f32.mxu0 0.0
          %402 = vmatmul.mubr.f32.gmra.mxu0 %v308
          %v403 = vpop.f32.mrf.mxu0
          %v404 = vadd.f32 %v330, %v403
          %v405 = vpop.f32.mrf.mxu0
          %406 = vdwg.mxu0
          %v407 = vtanh.pop %v399
          %v408 = vtanh.pop %v404
          %409 = vst [vmem:[#allocation2] sm:$0xff] %v407
          %410 = vst [vmem:[#allocation2 + $0x8] sm:$0xff] %v408
        $region56: #{tpu_custom_call.1} parent=39 // pred_fallthru
          _
        %v411 = vld [vmem:[#allocation2] sm:$0xff]
        %v412 = vld [vmem:[#allocation2 + $0x8] sm:$0xff]
        %v413 = vld [vmem:[#allocation8] sm:$0xff]
        %v414 = vld [vmem:[#allocation8 + $0x8] sm:$0xff]
        %v415 = vld [vmem:[#allocation8 + $0x10] sm:$0xff]
        %v416 = vld [vmem:[#allocation8 + $0x18] sm:$0xff]
        %v417 = vld [vmem:[#allocation8 + $0x20] sm:$0xff]
        %v418 = vld [vmem:[#allocation8 + $0x28] sm:$0xff]
        %v419 = vld [vmem:[#allocation8 + $0x30] sm:$0xff]
        %v420 = vld [vmem:[#allocation8 + $0x38] sm:$0xff]
        %v421 = vld [vmem:[#allocation8 + $0x40] sm:$0xff]
        %v422 = vld [vmem:[#allocation8 + $0x48] sm:$0xff]
        %v423 = vld [vmem:[#allocation8 + $0x50] sm:$0xff]
        %v424 = vld [vmem:[#allocation8 + $0x58] sm:$0xff]
        %v425 = vld [vmem:[#allocation8 + $0x60] sm:$0xff]
        %v426 = vld [vmem:[#allocation8 + $0x68] sm:$0xff]
        %v427 = vld [vmem:[#allocation8 + $0x70] sm:$0xff]
        %v428 = vld [vmem:[#allocation8 + $0x78] sm:$0xff]
        %v429 = vld [vmem:[%s4] sm:$0x1]
        %v431 = vlaneseq
        %v432 = vshrl.u32 %v431, 7
        %v433 = vsub.s32 0, %v432
        %v434 = vrot.slane %v429, %v433
        %436 = vmatprep.subr.mxu0 0.0
        %437 = vmatpush1.msra.mxu0 %v428
        %438 = vmatprep.subr.mxu0 0.0
        %439 = vmatpush1.msra.mxu0 %v427
        %440 = vmatprep.subr.mxu0 0.0
        %441 = vmatpush1.msra.mxu0 %v426
        %442 = vmatprep.subr.mxu0 0.0
        %443 = vmatpush1.msra.mxu0 %v425
        %444 = vmatprep.subr.mxu0 0.0
        %445 = vmatpush1.msra.mxu0 %v424
        %446 = vmatprep.subr.mxu0 0.0
        %447 = vmatpush1.msra.mxu0 %v423
        %448 = vmatprep.subr.mxu0 0.0
        %449 = vmatpush1.msra.mxu0 %v422
        %450 = vmatprep.subr.mxu0 0.0
        %451 = vmatpush1.msra.mxu0 %v421
        %452 = vmatprep.subr.mxu0 0.0
        %453 = vmatpush1.msra.mxu0 %v420
        %454 = vmatprep.subr.mxu0 0.0
        %455 = vmatpush1.msra.mxu0 %v419
        %456 = vmatprep.subr.mxu0 0.0
        %457 = vmatpush1.msra.mxu0 %v418
        %458 = vmatprep.subr.mxu0 0.0
        %459 = vmatpush1.msra.mxu0 %v417
        %460 = vmatprep.subr.mxu0 0.0
        %461 = vmatpush1.msra.mxu0 %v416
        %462 = vmatprep.subr.mxu0 0.0
        %463 = vmatpush1.msra.mxu0 %v415
        %464 = vmatprep.subr.mxu0 0.0
        %465 = vmatpush1.msra.mxu0 %v414
        %466 = vmatprep.subr.mxu0 0.0
        %467 = vmatpush1.msra.mxu0 %v413
        %468 = vmatprep.subr.mxu0 0.0
        %469 = vmatpush2.msra.mxu0 0.0
        %470 = vmatprep.subr.mxu0 0.0
        %471 = vmatpush2.msra.mxu0 0.0
        %472 = vmatprep.subr.mxu0 0.0
        %473 = vmatpush2.msra.mxu0 0.0
        %474 = vmatprep.subr.mxu0 0.0
        %475 = vmatpush2.msra.mxu0 0.0
        %476 = vmatprep.subr.mxu0 0.0
        %477 = vmatpush2.msra.mxu0 0.0
        %478 = vmatprep.subr.mxu0 0.0
        %479 = vmatpush2.msra.mxu0 0.0
        %480 = vmatprep.subr.mxu0 0.0
        %481 = vmatpush2.msra.mxu0 0.0
        %482 = vmatprep.subr.mxu0 0.0
        %483 = vmatpush2.msra.mxu0 0.0
        %484 = vmatprep.subr.mxu0 0.0
        %485 = vmatpush2.msra.mxu0 0.0
        %486 = vmatprep.subr.mxu0 0.0
        %487 = vmatpush2.msra.mxu0 0.0
        %488 = vmatprep.subr.mxu0 0.0
        %489 = vmatpush2.msra.mxu0 0.0
        %490 = vmatprep.subr.mxu0 0.0
        %491 = vmatpush2.msra.mxu0 0.0
        %492 = vmatprep.subr.mxu0 0.0
        %493 = vmatpush2.msra.mxu0 0.0
        %494 = vmatprep.subr.mxu0 0.0
        %495 = vmatpush2.msra.mxu0 0.0
        %496 = vmatprep.subr.mxu0 0.0
        %497 = vmatpush2.msra.mxu0 0.0
        %498 = vmatprep.subr.mxu0 0.0
        %499 = vmatpush2.msra.mxu0 0.0
        %500 = vmatprep.mubr.f32.mxu0 0.0
        %501 = vmatmul.mubr.f32.gmra.mxu0 %v411
        %v502 = vpop.f32.mrf.mxu0
        %v503 = vadd.f32 %v434, %v502
        %v504 = vpop.f32.mrf.mxu0
        %505 = vmatprep.mubr.f32.mxu0 0.0
        %506 = vmatmul.mubr.f32.gmra.mxu0 %v412
        %v507 = vpop.f32.mrf.mxu0
        %v508 = vadd.f32 %v434, %v507
        %v509 = vpop.f32.mrf.mxu0
        %510 = vdwg.mxu0
        %511 = vst [vmem:[%s292] sm:$0xff] %v503
        %512 = vst [vmem:[%s292 + $0x8] sm:$0xff] %v508
        %s513 = sand.u32 %s155, 1
        %s514 = scalar_lea.sflag [#allocation5], %s513
        %s515 = sand.u32 %s155, 1
        %s516 = smul.addr %s515, 16
        %s517 = scalar_lea.vmem [#allocation9], %s516
        // Predicated region
        $region57: #{tpu_custom_call.1} parent=39 // pred_check
          %p518 = pneg %p165
        $region58: #{tpu_custom_call.1} parent=39 // pred_check_branch
          %520 = sbr.rel (%p518) target = $region60
        $region59: #{tpu_custom_call.1} parent=39 // pred_region
          %s521 = smul.u32 2, %s27
          %s522 = ssub.s32 3, %s521
          %p523 = scmp.lt.s32.totalorder %s522, 2
          %s524 = scalar_select %p523, %s522, 2
          %s525 = smul.u32 128, %s524
          %s527 = ssub.s32 256, %s525
          %528 = vsyncadd %s514, %s527
          %p529 = scmp.ne.s32.totalorder 0, %s525
          %s530 = sadd.s32 %s28, %s521
          %s531 = smul.addr %s530, 128
          %s532 = scalar_lea.hbm %s5, %s531
          %s533 = smul.u32 8, %s524
          %s534 = sshll.u32 %s517, 4
          %s535 = int_to_ptr.vmem [resolvable:$true] %s534
          %s536 = sshll.u32 %s533, 4
          %540 = dma.vmem_to_hbm [thread:$0]  (%p529), %s535, %s536, %s532, %s514, 128, 128, 8
        $region60: #{tpu_custom_call.1} parent=39 // pred_fallthru
          _
      $region40: #{tpu_custom_call.1} parent=5 // pred_fallthru
        _
      %p541 = scmp.le.s32.totalorder 2, %s18
      // Predicated region
      $region61: #{tpu_custom_call.1} parent=5 // pred_check
        %p542 = pneg %p541
      $region62: #{tpu_custom_call.1} parent=5 // pred_check_branch
        %544 = sbr.rel (%p542) target = $region64
      $region63: #{tpu_custom_call.1} parent=5 // pred_region
        %s545 = ssub.s32 %s18, 2
        // Predicated region
        $region65: #{tpu_custom_call.1} parent=63 // pred_check
          %p546 = pneg %p171
        $region66: #{tpu_custom_call.1} parent=63 // pred_check_branch
          %548 = sbr.rel (%p546) target = $region68
        $region67: #{tpu_custom_call.1} parent=63 // pred_region
          %s549 = sand.u32 %s156, 1
          %s550 = scalar_lea.sflag [#allocation5], %s549
          %s551 = sand.u32 %s156, 1
          %s552 = smul.addr %s551, 16
          %s553 = scalar_lea.vmem [#allocation9], %s552
          %554 = dma.done %s550, 256
        $region68: #{tpu_custom_call.1} parent=63 // pred_fallthru
          _
      $region64: #{tpu_custom_call.1} parent=5 // pred_fallthru
        _
    $region6: #{tpu_custom_call.1} parent=1 // loop_footer
      %s22 = sadd.s32 1, %s18
    $region7: #{tpu_custom_call.1} parent=1 // loop_footer_branch
      %17 = sbr.rel target = $region3
    $region8: #{tpu_custom_call.1} parent=1 // loop_exit
      _
    %555 = vsyncpa [#allocation4], 1
    %s556 = scalar_lea.sflag [#allocation4], 1
    %557 = vsyncpa %s556, 1
    %558 = vsyncpa [#allocation7], 1
    %559 = vsyncpa [#allocation5], 1
    %s560 = scalar_lea.sflag [#allocation5], 1
    %561 = vsyncpa %s560, 1

</llo_original>
